<compile_context>
chip_gen: v7x
topology: tpu7x:2x2x1
jax: 0.10.0
libtpu: 0.0.40
codegen_flags: <defaults>
</compile_context>

<pallas_src>
import math

import jax
import jax.numpy as jnp
from jax.experimental import pallas as pl
from jax.experimental.pallas import tpu as pltpu

# Dataset statistics (from ImageAugment.MEAN / ImageAugment.STD)
MEAN = {
    "cifar10": [0.4914, 0.4822, 0.4465],
    "cifar100": [0.5071, 0.4867, 0.4408],
    "svhn": [0.4359, 0.442, 0.4709],
    "stl10": [0.485, 0.456, 0.406],
    "tinyimagenet": [0.485, 0.456, 0.406],
    "imagenet": [0.485, 0.456, 0.406],
}
STD = {
    "cifar10": [0.247, 0.243, 0.261],
    "cifar100": [0.268, 0.257, 0.276],
    "svhn": [0.197, 0.2, 0.196],
    "stl10": [0.229, 0.224, 0.225],
    "tinyimagenet": [0.229, 0.224, 0.225],
    "imagenet": [0.229, 0.224, 0.225],
}

# ~2 MiB per buffer: (in + out) * double-buffering ~= 8 MiB VMEM, safe on the
# v5e 16 MiB scoped default, v6e 32 MiB, and v7x 64 MiB physical VMEM.
# (On v7x, bumping this to ~4 MiB is worthwhile: 3.2 TB/s HBM makes the fixed
# ~0.35 us grid-step overhead proportionally larger.)
_DEFAULT_BLOCK_BUDGET_BYTES = 2 * 1024 * 1024
_VMEM_LIMIT_BYTES = 32 * 1024 * 1024


def _make_normalize_kernel(scale_ch, shift_ch):
    """Kernel with per-channel scale/shift baked in as compile-time constants.

    Row blocks always start on a channel boundary (row_block is a multiple of
    C, or equals the full N*C extent), so the channel of row r within a tile is
    simply r % C.
    """
    num_ch = len(scale_ch)

    def kernel(img_ref, out_ref):
        x = img_ref[...].astype(jnp.float32)
        rb = x.shape[0]
        ch = jax.lax.broadcasted_iota(jnp.int32, (rb, 1), 0) % num_ch
        scale = jnp.full((rb, 1), scale_ch[-1], jnp.float32)
        shift = jnp.full((rb, 1), shift_ch[-1], jnp.float32)
        for c in range(num_ch - 1):
            scale = jnp.where(ch == c, jnp.float32(scale_ch[c]), scale)
            shift = jnp.where(ch == c, jnp.float32(shift_ch[c]), shift)
        out_ref[...] = (x * scale + shift).astype(out_ref.dtype)

    return kernel


def _block_dims(rows, cols, num_ch, in_itemsize, out_itemsize, budget_bytes):
    """Pick an (8,128)-legal block shape sized by a byte budget per buffer.

    - Column block: full extent if small, otherwise a multiple of 128 capped so
      that (a) the tile fits the budget even at the minimal row quantum and
      (b) there are at least 2 column blocks (v7x: 2 TensorCores).
      Pallas masks the remainder tile, so cols need not divide the block.
    - Row block: multiple of lcm(C, sublane packing) so tiles start on channel
      boundaries and packed (bf16/int8) loads stay unmasked, or the full extent.
    """
    elem_bytes = max(in_itemsize, out_itemsize)
    budget_elems = max(128, budget_bytes // elem_bytes)

    # Sublane quantum: 32 covers every packing (f32=8, bf16=16, int8=32).
    pack = 32 if (in_itemsize < 4 or out_itemsize < 4) else 8
    row_quant = math.lcm(num_ch, pack)

    if cols < 256:
        col_block = cols  # full extent — always legal
    else:
        cap = max(128, (budget_elems // row_quant // 128) * 128)
        half = max(128, (cols // 2 // 128) * 128)  # guarantees >= 2 col blocks
        col_block = min(cap, half)

    row_budget = max(1, budget_elems // col_block)
    if rows <= max(row_budget, row_quant):
        row_block = rows  # full extent (rows = N*C is a multiple of C)
    else:
        row_block = max(row_quant, (row_budget // row_quant) * row_quant)
    return row_block, col_block


def image_augment_normalize(
    img: jax.Array,
    data: str = "cifar10",
    out_dtype=jnp.float32,
    block_budget_bytes: int = _DEFAULT_BLOCK_BUDGET_BYTES,
) -> jax.Array:
    """Per-channel normalization, NCHW layout, matching torchvision Normalize.

    Integer inputs (e.g. uint8) get ToTensor's 1/255 folded into the scale so
    the result matches `Normalize(ToTensor(img))`.
    """
    if data not in MEAN:
        raise ValueError(f"Unsupported dataset: '{data}'.")
    N, C, H, W = img.shape
    mean = MEAN[data]
    std = STD[data]
    if C != len(mean):
        raise ValueError(f"Expected {len(mean)} channels for '{data}', got {C}.")

    # Fold ToTensor's 1/255 for integer sources (torchvision semantics).
    to_unit = 1.0 / 255.0 if jnp.issubdtype(img.dtype, jnp.integer) else 1.0
    scale_ch = tuple(to_unit / s for s in std)
    shift_ch = tuple(-m / s for m, s in zip(mean, std))

    rows, cols = N * C, H * W
    img2d = img.reshape(rows, cols)  # free metadata reshape for contiguous NCHW

    out_dtype = jnp.dtype(out_dtype)
    in_itemsize = jnp.dtype(img.dtype).itemsize
    rb, cb = _block_dims(rows, cols, C, in_itemsize, out_dtype.itemsize,
                         block_budget_bytes)
    grid = (pl.cdiv(rows, rb), pl.cdiv(cols, cb))

    out2d = pl.pallas_call(
        _make_normalize_kernel(scale_ch, shift_ch),
        out_shape=jax.ShapeDtypeStruct((rows, cols), out_dtype),
        grid=grid,
        in_specs=[pl.BlockSpec((rb, cb), lambda i, j: (i, j))],
        out_specs=pl.BlockSpec((rb, cb), lambda i, j: (i, j)),
        compiler_params=pltpu.CompilerParams(
            dimension_semantics=("parallel", "parallel"),
            vmem_limit_bytes=_VMEM_LIMIT_BYTES,
        ),
        cost_estimate=pl.CostEstimate(
            flops=2 * rows * cols,
            transcendentals=0,
            bytes_accessed=rows * cols * (in_itemsize + out_dtype.itemsize),
        ),
    )(img2d)

    return out2d.reshape(N, C, H, W)


if __name__ == "__main__":
    key = jax.random.PRNGKey(0)
    # Small NCHW batch: 2 images, 3 channels (RGB), 16x16 spatial (size=(16,16)).
    x = jax.random.uniform(key, (2, 3, 16, 16), dtype=jnp.float32)

    # f32 in -> f32 out
    out = jax.block_until_ready(image_augment_normalize(x, data="cifar10"))
    mean = jnp.asarray(MEAN["cifar10"], jnp.float32).reshape(1, 3, 1, 1)
    std = jnp.asarray(STD["cifar10"], jnp.float32).reshape(1, 3, 1, 1)
    ref = (x - mean) / std
    assert out.shape == (2, 3, 16, 16) and out.dtype == jnp.float32
    assert jnp.allclose(out, ref, atol=1e-5, rtol=1e-5)

    # bf16 in -> bf16 out (in-kernel cast, half the HBM write traffic)
    x_bf16 = x.astype(jnp.bfloat16)
    out_bf16 = jax.block_until_ready(
        image_augment_normalize(x_bf16, data="imagenet", out_dtype=jnp.bfloat16)
    )
    mean_i = jnp.asarray(MEAN["imagenet"], jnp.float32).reshape(1, 3, 1, 1)
    std_i = jnp.asarray(STD["imagenet"], jnp.float32).reshape(1, 3, 1, 1)
    ref_i = (x_bf16.astype(jnp.float32) - mean_i) / std_i
    assert out_bf16.dtype == jnp.bfloat16
    assert jnp.allclose(out_bf16.astype(jnp.float32), ref_i, atol=2e-2, rtol=2e-2)

    print("KERNEL_OK")
</pallas_src>

<mosaic_0001>
module attributes {stable_mosaic.version = 11 : i64} {
  func.func @kernel(%arg0: i32, %arg1: i32, %arg2: memref<6x128xf32, #tpu.memory_space<vmem>>, %arg3: memref<6x128xf32, #tpu.memory_space<vmem>>) attributes {dimension_semantics = [#tpu.dimension_semantics<parallel>, #tpu.dimension_semantics<parallel>], iteration_bounds = array<i64: 1, 2>, scalar_prefetch = 0 : i64, scratch_operands = 0 : i64, tpu.core_type = #tpu.core_type<tc>, window_params = [{transform_indices = @transform_0, window_bounds = array<i64: 6, 128>}, {transform_indices = @transform_1, window_bounds = array<i64: 6, 128>}]} {
    %c0 = arith.constant 0 : index
    %c0_0 = arith.constant 0 : index
    %0 = vector.load %arg2[%c0, %c0_0] : memref<6x128xf32, #tpu.memory_space<vmem>>, vector<6x128xf32>
    %1 = tpu.iota {dimensions = array<i32: 0>} : vector<6x1xi32>
    %c3_i32 = arith.constant 3 : i32
    %c0_i32 = arith.constant 0 : i32
    %2 = arith.cmpi eq, %c3_i32, %c0_i32 : i32
    %c1_i32 = arith.constant 1 : i32
    %3 = arith.select %2, %c1_i32, %c3_i32 : i32
    %4 = vector.broadcast %3 : i32 to vector<6x1xi32>
    %5 = arith.remsi %1, %4 : vector<6x1xi32>
    %c0_i32_1 = arith.constant 0 : i32
    %6 = vector.broadcast %c0_i32_1 : i32 to vector<6x1xi32>
    %7 = arith.cmpi ne, %5, %6 : vector<6x1xi32>
    %c0_i32_2 = arith.constant 0 : i32
    %8 = vector.broadcast %c0_i32_2 : i32 to vector<6x1xi32>
    %9 = arith.cmpi slt, %5, %8 : vector<6x1xi32>
    %c0_i32_3 = arith.constant 0 : i32
    %10 = arith.cmpi slt, %3, %c0_i32_3 : i32
    %11 = vector.broadcast %10 : i1 to vector<6x1xi1>
    %12 = vector.broadcast %11 : vector<6x1xi1> to vector<6x1xi1>
    %13 = arith.xori %9, %12 : vector<6x1xi1>
    %14 = arith.andi %13, %7 : vector<6x1xi1>
    %15 = vector.broadcast %3 : i32 to vector<6x1xi32>
    %16 = arith.addi %5, %15 : vector<6x1xi32>
    %17 = arith.select %14, %16, %5 : vector<6x1xi1>, vector<6x1xi32>
    %cst = arith.constant 3.83141756 : f32
    %18 = vector.broadcast %cst : f32 to vector<6x1xf32>
    %cst_4 = arith.constant -1.71072793 : f32
    %19 = vector.broadcast %cst_4 : f32 to vector<6x1xf32>
    %c0_i32_5 = arith.constant 0 : i32
    %20 = vector.broadcast %c0_i32_5 : i32 to vector<6x1xi32>
    %21 = arith.cmpi eq, %17, %20 : vector<6x1xi32>
    %cst_6 = arith.constant 4.04858303 : f32
    %22 = vector.broadcast %cst_6 : f32 to vector<6x1xf32>
    %23 = arith.select %21, %22, %18 : vector<6x1xi1>, vector<6x1xf32>
    %c0_i32_7 = arith.constant 0 : i32
    %24 = vector.broadcast %c0_i32_7 : i32 to vector<6x1xi32>
    %25 = arith.cmpi eq, %17, %24 : vector<6x1xi32>
    %cst_8 = arith.constant -1.9894737 : f32
    %26 = vector.broadcast %cst_8 : f32 to vector<6x1xf32>
    %27 = arith.select %25, %26, %19 : vector<6x1xi1>, vector<6x1xf32>
    %c1_i32_9 = arith.constant 1 : i32
    %28 = vector.broadcast %c1_i32_9 : i32 to vector<6x1xi32>
    %29 = arith.cmpi eq, %17, %28 : vector<6x1xi32>
    %cst_10 = arith.constant 4.11522627 : f32
    %30 = vector.broadcast %cst_10 : f32 to vector<6x1xf32>
    %31 = arith.select %29, %30, %23 : vector<6x1xi1>, vector<6x1xf32>
    %c1_i32_11 = arith.constant 1 : i32
    %32 = vector.broadcast %c1_i32_11 : i32 to vector<6x1xi32>
    %33 = arith.cmpi eq, %17, %32 : vector<6x1xi32>
    %cst_12 = arith.constant -1.98436213 : f32
    %34 = vector.broadcast %cst_12 : f32 to vector<6x1xf32>
    %35 = arith.select %33, %34, %27 : vector<6x1xi1>, vector<6x1xf32>
    %36 = vector.broadcast %31 : vector<6x1xf32> to vector<6x128xf32>
    %37 = arith.mulf %0, %36 : vector<6x128xf32>
    %38 = vector.broadcast %35 : vector<6x1xf32> to vector<6x128xf32>
    %39 = arith.addf %37, %38 : vector<6x128xf32>
    %c0_13 = arith.constant 0 : index
    %c0_14 = arith.constant 0 : index
    %40 = vector.load %arg3[%c0_13, %c0_14] : memref<6x128xf32, #tpu.memory_space<vmem>>, vector<6x128xf32>
    tpu.vector_store %arg3[%c0_13, %c0_14], %39 {strides = array<i32>} : memref<6x128xf32, #tpu.memory_space<vmem>>, vector<6x128xf32>,
    return
  }
  func.func @transform_0(%arg0: i32, %arg1: i32) -> (i32, i32) {
    %c0_i32 = arith.constant 0 : i32
    return %arg0, %arg1 : i32, i32
  }
  func.func @transform_1(%arg0: i32, %arg1: i32) -> (i32, i32) {
    %c0_i32 = arith.constant 0 : i32
    return %arg0, %arg1 : i32, i32
  }
}

</mosaic_0001>

<llo_original>
// kernel: tpu_custom_call.1
$region0: #{tpu_custom_call.1}
  #allocation0 [shape = 'u32[]', space=smem, size = 0x4, offset = 0x4, fixed_abs, tag = 'smem constant byte address 0x4 - core index']
  #allocation1 [shape = 'u32[144,128]{1,0:T(1,128)}', space=vmem, size = 0x12000, scoped, tag = 'internal scratch']
  %s0 = inlined_call_operand.hbm [shape: f32[6,256], index: 0, kind: input, shape index: {}]
  %s1 = inlined_call_operand.hbm [shape: f32[6,256], index: 1, kind: output, shape index: {}]
  %s2 = sld [smem:[#allocation0]]
  $region41: #{tpu_custom_call.1} parent=0
    _
  %s4 = ssub.s32 1, %s2
  %s5 = scalar_select 0, %s4, %s2
  $region1: #{tpu_custom_call.1} parent=0
    #allocation2 [shape = 'u8[8192]{0}', space=vmem, size = 0x2000, scoped, tag = 'input window, operand 0']
    #allocation3 [shape = 's32[2]{0}', space=sflag, size = 0x8, scoped, tag = 'scoped memory for tpu_custom_call.1']
    #allocation4 [shape = 's32[2]{0}', space=sflag, size = 0x8, scoped, tag = 'scoped memory for tpu_custom_call.1']
    #allocation5 [shape = 'u8[8192]{0}', space=vmem, size = 0x2000, scoped, tag = 'output window, operand 0']
    %6 = vsyncpa [#allocation3], 0
    %s7 = scalar_lea.sflag [#allocation3], 1
    %8 = vsyncpa %s7, 0
    %9 = vsyncpa [#allocation4], 0
    %s10 = scalar_lea.sflag [#allocation4], 1
    %11 = vsyncpa %s10, 0
    loop: start=0, step=1, limit=4
    $region2: #{tpu_custom_call.1} parent=1 // loop_pre_header
      _
    $region3: #{tpu_custom_call.1} parent=1 // loop_header
      %s13 = sphi 0, %s17
      %p14 = scmp.ge.s32.totalorder %s13, 4
      %s20 = sphi 0, %s32
      %s21 = sphi 0, %s28
      %s22 = sphi 0, %s20
      %s23 = sphi 0, %s21
      %s24 = sphi 0, %s22
      %s25 = sphi 0, %s23
      %s37 = sphi 0, %s39
      %s40 = sphi 0, %s37
      %s41 = sphi 0, %s40
      %s57 = sphi 0, %s41
      %s65 = sphi 0, %s67
      %s68 = sphi 0, %s65
      %s69 = sphi 0, %s68
      %s85 = sphi 0, %s69
    $region4: #{tpu_custom_call.1} parent=1 // loop_header_branch
      %16 = sbr.rel (%p14) target = $region8
    $region5: #{tpu_custom_call.1} parent=1 // loop_body
      %s18 = ssub.s32 %s13, 1
      %s19 = ssub.s32 %s13, 2
      %s26 = sadd.s32 1, %s21
      %p27 = scmp.ge.s32.totalorder %s26, 2
      %s28 = scalar_select %p27, 0, %s26
      %s29 = sadd.s32 1, %s20
      %s30 = scalar_select %p27, %s29, %s20
      %p31 = scmp.ge.s32.totalorder %s30, 1
      %s32 = scalar_select %p31, 0, %s30
      %s33 = ssub.s32 %s20, %s32
      %s34 = ssub.s32 %s21, %s28
      %s35 = sor.u32 %s33, %s34
      %p36 = scmp.eq.s32.totalorder %s35, 0
      %s38 = sadd.s32 %s37, 1
      %s39 = scalar_select %p36, %s37, %s38
      %p42 = pneg %p36
      %p43 = scmp.eq.s32.totalorder %s13, 1
      %p44 = por %p42, %p43
      %p45 = scmp.ne.s32.totalorder %s37, %s40
      %p46 = scmp.eq.s32.totalorder %s13, 0
      %p47 = por %p45, %p46
      %p48 = scmp.ne.s32.totalorder %s37, %s40
      %p49 = scmp.eq.s32.totalorder %s18, 1
      %p50 = por %p48, %p49
      %p51 = scmp.ne.s32.totalorder %s40, %s41
      %p52 = scmp.eq.s32.totalorder %s18, 0
      %p53 = por %p51, %p52
      %p54 = scmp.ne.s32.totalorder %s40, %s41
      %p55 = scmp.eq.s32.totalorder %s19, 1
      %p56 = por %p54, %p55
      %p58 = scmp.ne.s32.totalorder %s41, %s57
      %p59 = scmp.eq.s32.totalorder %s19, 0
      %p60 = por %p58, %p59
      %s61 = ssub.s32 %s20, %s32
      %s62 = ssub.s32 %s21, %s28
      %s63 = sor.u32 %s61, %s62
      %p64 = scmp.eq.s32.totalorder %s63, 0
      %s66 = sadd.s32 %s65, 1
      %s67 = scalar_select %p64, %s65, %s66
      %p70 = pneg %p64
      %p71 = scmp.eq.s32.totalorder %s13, 1
      %p72 = por %p70, %p71
      %p73 = scmp.ne.s32.totalorder %s65, %s68
      %p74 = scmp.eq.s32.totalorder %s13, 0
      %p75 = por %p73, %p74
      %p76 = scmp.ne.s32.totalorder %s65, %s68
      %p77 = scmp.eq.s32.totalorder %s18, 1
      %p78 = por %p76, %p77
      %p79 = scmp.ne.s32.totalorder %s68, %s69
      %p80 = scmp.eq.s32.totalorder %s18, 0
      %p81 = por %p79, %p80
      %p82 = scmp.ne.s32.totalorder %s68, %s69
      %p83 = scmp.eq.s32.totalorder %s19, 1
      %p84 = por %p82, %p83
      %p86 = scmp.ne.s32.totalorder %s69, %s85
      %p87 = scmp.eq.s32.totalorder %s19, 0
      %p88 = por %p86, %p87
      %p89 = scmp.le.s32.totalorder 1, %s13
      %p90 = scmp.lt.s32.totalorder %s13, 3
      %p91 = pnand %p89, %p90
      %p92 = pneg %p91
      // Predicated region
      $region9: #{tpu_custom_call.1} parent=5 // pred_check
        _
      $region10: #{tpu_custom_call.1} parent=5 // pred_check_branch
        %94 = sbr.rel (%p91) target = $region12
      $region11: #{tpu_custom_call.1} parent=5 // pred_region
        %s95 = ssub.s32 %s13, 1
      $region12: #{tpu_custom_call.1} parent=5 // pred_fallthru
        _
      %p96 = scmp.lt.s32.totalorder %s13, 2
      // Predicated region
      $region13: #{tpu_custom_call.1} parent=5 // pred_check
        %p97 = pneg %p96
      $region14: #{tpu_custom_call.1} parent=5 // pred_check_branch
        %99 = sbr.rel (%p97) target = $region16
      $region15: #{tpu_custom_call.1} parent=5 // pred_region
        // Predicated region
        $region17: #{tpu_custom_call.1} parent=15 // pred_check
          %p100 = pneg %p47
        $region18: #{tpu_custom_call.1} parent=15 // pred_check_branch
          %102 = sbr.rel (%p100) target = $region20
        $region19: #{tpu_custom_call.1} parent=15 // pred_region
          %s103 = sand.u32 %s37, 1
          %s104 = scalar_lea.sflag [#allocation3], %s103
          %s105 = sand.u32 %s37, 1
          %s106 = smul.addr %s105, 8
          %s107 = scalar_lea.vmem [#allocation2], %s106
          %s109 = ssub.s32 128, 128
          %110 = vsyncadd %s104, %s109
          %s111 = smul.addr %s20, 2
          %s112 = sadd.s32 %s21, %s111
          %s113 = smul.addr %s112, 128
          %s114 = scalar_lea.hbm %s0, %s113
          %s116 = sshll.u32 %s107, 4
          %s117 = int_to_ptr.vmem [resolvable:$true] %s116
          %119 = dma.hbm_to_vmem [thread:$0]  %s114, 128, %s117, %s104
        $region20: #{tpu_custom_call.1} parent=15 // pred_fallthru
          _
      $region16: #{tpu_custom_call.1} parent=5 // pred_fallthru
        _
      %p120 = scmp.le.s32.totalorder 1, %s13
      %p121 = scmp.lt.s32.totalorder %s13, 3
      %p122 = pnand %p120, %p121
      %p123 = pneg %p122
      // Predicated region
      $region21: #{tpu_custom_call.1} parent=5 // pred_check
        _
      $region22: #{tpu_custom_call.1} parent=5 // pred_check_branch
        %125 = sbr.rel (%p122) target = $region24
      $region23: #{tpu_custom_call.1} parent=5 // pred_region
        %s126 = ssub.s32 %s13, 1
        %s127 = sand.u32 %s40, 1
        %s128 = scalar_lea.sflag [#allocation3], %s127
        %s129 = sand.u32 %s40, 1
        %s130 = smul.addr %s129, 8
        %s131 = scalar_lea.vmem [#allocation2], %s130
        // Predicated region
        $region25: #{tpu_custom_call.1} parent=23 // pred_check
          %p132 = pneg %p53
        $region26: #{tpu_custom_call.1} parent=23 // pred_check_branch
          %134 = sbr.rel (%p132) target = $region28
        $region27: #{tpu_custom_call.1} parent=23 // pred_region
          %135 = dma.done %s128, 128
        $region28: #{tpu_custom_call.1} parent=23 // pred_fallthru
          _
        %s136 = sand.u32 %s40, 1
        %s137 = scalar_lea.sflag [#allocation3], %s136
        %s138 = sand.u32 %s40, 1
        %s139 = smul.addr %s138, 8
        %s140 = scalar_lea.vmem [#allocation2], %s139
        %p141 = pneg %p53
        %p142 = pneg %p50
        %p143 = pneg %p81
        %p144 = pneg %p78
        %s145 = sand.u32 %s68, 1
        %s146 = scalar_lea.sflag [#allocation4], %s145
        %s147 = sand.u32 %s68, 1
        %s148 = smul.addr %s147, 8
        %s149 = scalar_lea.vmem [#allocation5], %s148
        %v150 = vld [vmem:[%s131] sm:$0x3f]
        %v151 = vlaneseq
        %v152 = vshrl.u32 %v151, 7
        %vm153 = vcmp.lt.s32.totalorder %v152, 0
        %v154 = vsub.s32 0, %v152
        %v155 = vsel %vm153, %v154, %v152
        %v156 = vmul.u32.u64.compose %v155, 2863311531
        %v157 = vextract.low.u32 %v156
        %v158 = vextract.high.u32 %v156
        %v159 = vshrl.u32 %v158, 1
        %v160 = vmul.u32 %v159, 3
        %v161 = vsub.s32 %v155, %v160
        %v162 = vsub.s32 0, %v161
        %v163 = vsel %vm153, %v162, %v161
        %vm164 = vcmp.ne.s32.totalorder %v163, 0
        %vm165 = vcmp.lt.s32.totalorder %v163, 0
        %vm166 = vmand %vm165, %vm164
        %v167 = vadd.s32 %v163, 3
        %v168 = vsel %vm166, %v167, %v163
        %vm169 = vcmp.eq.s32.totalorder %v168, 0
        %v170 = vsel %vm169, 4.048583, 3.8314176
        %v171 = vsel %vm169, -1.9894737, -1.7107279
        %vm172 = vcmp.eq.s32.totalorder %v168, 1
        %v173 = vsel %vm172, 4.1152263, %v170
        %v174 = vsel %vm172, -1.9843621, %v171
        %v175 = vmul.f32 %v150, %v173
        %v176 = vadd.f32 %v175, %v174
        %177 = vst [vmem:[%s149] sm:$0x3f] %v176
        %s178 = sand.u32 %s68, 1
        %s179 = scalar_lea.sflag [#allocation4], %s178
        %s180 = sand.u32 %s68, 1
        %s181 = smul.addr %s180, 8
        %s182 = scalar_lea.vmem [#allocation5], %s181
        // Predicated region
        $region29: #{tpu_custom_call.1} parent=23 // pred_check
          %p183 = pneg %p78
        $region30: #{tpu_custom_call.1} parent=23 // pred_check_branch
          %185 = sbr.rel (%p183) target = $region32
        $region31: #{tpu_custom_call.1} parent=23 // pred_region
          %s187 = ssub.s32 128, 128
          %188 = vsyncadd %s179, %s187
          %s189 = smul.addr %s22, 2
          %s190 = sadd.s32 %s23, %s189
          %s191 = smul.addr %s190, 128
          %s192 = scalar_lea.hbm %s1, %s191
          %s194 = sshll.u32 %s182, 4
          %s195 = int_to_ptr.vmem [resolvable:$true] %s194
          %197 = dma.vmem_to_hbm [thread:$0]  %s195, 128, %s192, %s179
        $region32: #{tpu_custom_call.1} parent=23 // pred_fallthru
          _
      $region24: #{tpu_custom_call.1} parent=5 // pred_fallthru
        _
      %p198 = scmp.le.s32.totalorder 2, %s13
      // Predicated region
      $region33: #{tpu_custom_call.1} parent=5 // pred_check
        %p199 = pneg %p198
      $region34: #{tpu_custom_call.1} parent=5 // pred_check_branch
        %201 = sbr.rel (%p199) target = $region36
      $region35: #{tpu_custom_call.1} parent=5 // pred_region
        %s202 = ssub.s32 %s13, 2
        // Predicated region
        $region37: #{tpu_custom_call.1} parent=35 // pred_check
          %p203 = pneg %p84
        $region38: #{tpu_custom_call.1} parent=35 // pred_check_branch
          %205 = sbr.rel (%p203) target = $region40
        $region39: #{tpu_custom_call.1} parent=35 // pred_region
          %s206 = sand.u32 %s69, 1
          %s207 = scalar_lea.sflag [#allocation4], %s206
          %s208 = sand.u32 %s69, 1
          %s209 = smul.addr %s208, 8
          %s210 = scalar_lea.vmem [#allocation5], %s209
          %211 = dma.done %s207, 128
        $region40: #{tpu_custom_call.1} parent=35 // pred_fallthru
          _
      $region36: #{tpu_custom_call.1} parent=5 // pred_fallthru
        _
    $region6: #{tpu_custom_call.1} parent=1 // loop_footer
      %s17 = sadd.s32 1, %s13
    $region7: #{tpu_custom_call.1} parent=1 // loop_footer_branch
      %12 = sbr.rel target = $region3
    $region8: #{tpu_custom_call.1} parent=1 // loop_exit
      _
    %212 = vsyncpa [#allocation3], 1
    %s213 = scalar_lea.sflag [#allocation3], 1
    %214 = vsyncpa %s213, 1
    %215 = vsyncpa [#allocation4], 1
    %s216 = scalar_lea.sflag [#allocation4], 1
    %217 = vsyncpa %s216, 1

</llo_original>
